<compile_context>
chip_gen: v6e
topology: v6e:2x2x1
jax: 0.10.0
libtpu: 0.0.40
codegen_flags: <defaults>
</compile_context>

<pallas_src>
import jax
import jax.numpy as jnp
from jax.experimental import pallas as pl
from jax.experimental.pallas import tpu as pltpu

RHO = 0.997
CP = 4185.5
TIME_REG = 1.0 / 3600.0


def ssm_white_kernel(gb_ref, ge_ref, pmat_ref, x0_ref,
                     m_ref, dT_ref, d_ref,
                     X_ref,
                     x_state):
    """One grid step = one time chunk = Kb blocks of L timesteps each.

    gb_ref  : (L*nu, L*nx)  blockdiag(scaled B^T) @ Toeplitz(A^{t-s})
    ge_ref  : (L*nd, L*nx)  blockdiag(E^T)        @ Toeplitz(A^{t-s})
    pmat_ref: (nx,   L*nx)  [A^1 | A^2 | ... | A^L]
    m/dT/d  : (Kb, batch, L*nu|L*nd) chunk of inputs, time-major inside a block
    X_ref   : (Kb, batch, L*nx)      chunk of states (lane-dense writeback)
    x_state : (batch, nx)            carried end-of-chunk state
    """
    c = pl.program_id(0)

    @pl.when(c == 0)
    def _():
        x_state[...] = x0_ref[...]

    gb = gb_ref[...]
    ge = ge_ref[...]
    pmat = pmat_ref[...]
    nx = pmat.shape[0]
    n_blk = X_ref.shape[0]

    def blk(b, x_prev):
        # Input-driven term + homogeneous term for L steps at once: three dense
        # MXU matmuls, K in {L*nu, L*nd, nx}, N = L*nx.
        u = m_ref[b] * dT_ref[b]                                   # (batch, L*nu)
        xb = (jnp.dot(u, gb, preferred_element_type=jnp.float32)
              + jnp.dot(d_ref[b], ge, preferred_element_type=jnp.float32)
              + jnp.dot(x_prev, pmat, preferred_element_type=jnp.float32))
        X_ref[b] = xb.astype(X_ref.dtype)                          # one dense store
        return xb[:, xb.shape[1] - nx:]                            # end-of-block state

    x_state[...] = jax.lax.fori_loop(
        0, n_blk, blk, x_state[...],
        unroll=True if n_blk <= 8 else 4)


def ssm_white_forward(params, x0, M_flow, DT, D, *,
                      time_chunk=1024, block_len=None):
    seq, batch, nu = M_flow.shape
    nd = D.shape[-1]
    nx = x0.shape[-1]

    # ---- one-time parameter transforms (hoisted out of the kernel) ----------
    s_cl = 1.0 - 0.1 * jax.nn.sigmoid(params["A_scalar"])
    a_eff = jnp.transpose(s_cl * jax.nn.softmax(params["A_weight"], axis=1)
                          ).astype(jnp.float32)                       # (nx, nx)
    scale = jnp.float32(RHO * CP * TIME_REG)
    bT = params["B_weight"].T.astype(jnp.float32) * scale             # (nu, nx)
    eT = params["E_weight"].T.astype(jnp.float32)                     # (nd, nx)

    # ---- block length L: target L*nx >= 256 (MXU width), no over-padding ----
    if block_len is None:
        L = max(1, pl.cdiv(256, nx))
    else:
        L = max(1, int(block_len))
    L = min(L, seq)

    n_blocks_needed = pl.cdiv(seq, L)
    Kb = max(1, min(pl.cdiv(time_chunk, L), n_blocks_needed))
    # VMEM budget: keep double-buffered inputs + output per chunk well under
    # the default scoped limit on every generation (v7x has only 64 MiB total).
    per_blk_bytes = batch * L * (2 * nu + nd + nx) * 4
    Kb = max(1, min(Kb, (8 * 1024 * 1024) // max(per_blk_bytes, 1)))
    n_chunks = pl.cdiv(n_blocks_needed, Kb)
    n_blocks = n_chunks * Kb
    seq_p = n_blocks * L

    pad = seq_p - seq
    if pad:
        p3 = ((0, pad), (0, 0), (0, 0))
        M_flow = jnp.pad(M_flow, p3)
        DT = jnp.pad(DT, p3)
        D = jnp.pad(D, p3)

    # ---- blocked-recurrence operators (one-time, tiny) -----------------------
    eye = jnp.eye(nx, dtype=jnp.float32)

    def pstep(p, _):
        pn = p @ a_eff
        return pn, pn

    _, pw_hi = jax.lax.scan(pstep, eye, None, length=L)          # A^1 .. A^L
    pw_low = jnp.concatenate([eye[None], pw_hi[:L - 1]], axis=0)  # A^0 .. A^{L-1}
    diff = jnp.arange(L)[None, :] - jnp.arange(L)[:, None]        # t - s
    Tb = jnp.where((diff >= 0)[:, :, None, None],
                   pw_low[jnp.clip(diff, 0, L - 1)], 0.0)         # (L,L,nx,nx) = A^{t-s}
    GB = jnp.einsum('ui,stij->stuj', bT, Tb
                    ).transpose(0, 2, 1, 3).reshape(L * nu, L * nx)
    GE = jnp.einsum('ui,stij->stuj', eT, Tb
                    ).transpose(0, 2, 1, 3).reshape(L * nd, L * nx)
    PLm = jnp.transpose(pw_hi, (1, 0, 2)).reshape(nx, L * nx)     # [A^1|...|A^L]

    # ---- layout plumbing: (seq, batch, f) -> (block, batch, L*f) slabs -------
    def to_blocks(arr, feat):
        return (arr.astype(jnp.float32)
                   .reshape(n_blocks, L, batch, feat)
                   .transpose(0, 2, 1, 3)
                   .reshape(n_blocks, batch, L * feat))

    m_b = to_blocks(M_flow, nu)
    dT_b = to_blocks(DT, nu)
    d_b = to_blocks(D, nd)

    X_blocks = pl.pallas_call(
        ssm_white_kernel,
        out_shape=jax.ShapeDtypeStruct((n_blocks, batch, L * nx), jnp.float32),
        grid_spec=pltpu.PrefetchScalarGridSpec(
            num_scalar_prefetch=0,
            grid=(n_chunks,),
            in_specs=[
                pl.BlockSpec((L * nu, L * nx), lambda c: (0, 0)),       # GB
                pl.BlockSpec((L * nd, L * nx), lambda c: (0, 0)),       # GE
                pl.BlockSpec((nx, L * nx), lambda c: (0, 0)),           # A powers
                pl.BlockSpec((batch, nx), lambda c: (0, 0)),            # x0
                pl.BlockSpec((Kb, batch, L * nu), lambda c: (c, 0, 0)),  # M_flow chunk
                pl.BlockSpec((Kb, batch, L * nu), lambda c: (c, 0, 0)),  # DT chunk
                pl.BlockSpec((Kb, batch, L * nd), lambda c: (c, 0, 0)),  # D chunk
            ],
            out_specs=pl.BlockSpec((Kb, batch, L * nx), lambda c: (c, 0, 0)),
            scratch_shapes=[pltpu.VMEM((batch, nx), jnp.float32)],       # carried x
        ),
        compiler_params=pltpu.CompilerParams(
            dimension_semantics=("arbitrary",)),       # sequential chunk recurrence
    )(GB, GE, PLm, x0.astype(jnp.float32), m_b, dT_b, d_b)

    X = (X_blocks.reshape(n_blocks, batch, L, nx)
                 .transpose(0, 2, 1, 3)
                 .reshape(seq_p, batch, nx)[:seq])
    Y = X[:, :, -1]          # glue: torch's Y.append(x[:, -1]) -> stack -> (seq, batch)
    return X, Y


def ssm_white_reference(params, x0, M_flow, DT, D):
    """Pure-JAX reference matching the PyTorch forward."""
    s_cl = 1.0 - 0.1 * jax.nn.sigmoid(params["A_scalar"])
    a_eff = jnp.transpose(s_cl * jax.nn.softmax(params["A_weight"], axis=1))
    bT = params["B_weight"].T
    eT = params["E_weight"].T

    def step(x, inp):
        m, dT, d = inp
        u = m * RHO * CP * TIME_REG * dT
        x = x @ a_eff + u @ bT + d @ eT
        return x, x

    _, X = jax.lax.scan(step, x0, (M_flow, DT, D))
    return X, X[:, :, -1]


if __name__ == "__main__":
    key = jax.random.PRNGKey(0)
    nx, nu, nd = 8, 4, 3          # nx states, nu heat-flow inputs, nd disturbances
    batch, seq = 2, 8

    ks = jax.random.split(key, 8)
    params = {
        # torch.rand -> U[0,1)
        "A_weight": jax.random.uniform(ks[0], (nx, nx), jnp.float32),
        "A_scalar": jax.random.uniform(ks[1], (nx, nx), jnp.float32),
        # nn.Linear default init -> U(-1/sqrt(fan_in), 1/sqrt(fan_in)), bias=False
        "B_weight": jax.random.uniform(ks[2], (nx, nu), jnp.float32,
                                       -1.0 / float(nu) ** 0.5, 1.0 / float(nu) ** 0.5),
        "E_weight": jax.random.uniform(ks[3], (nx, nd), jnp.float32,
                                       -1.0 / float(nd) ** 0.5, 1.0 / float(nd) ** 0.5),
    }
    x0 = jax.random.uniform(ks[4], (batch, nx), jnp.float32)
    M_flow = jax.random.uniform(ks[5], (seq, batch, nu), jnp.float32)
    DT = jax.random.uniform(ks[6], (seq, batch, nu), jnp.float32)
    D = jax.random.uniform(ks[7], (seq, batch, nd), jnp.float32)

    # Case 1: short sequence (single chunk, single block).
    X, Y = ssm_white_forward(params, x0, M_flow, DT, D)
    jax.block_until_ready((X, Y))
    X_ref, Y_ref = ssm_white_reference(params, x0, M_flow, DT, D)
    assert X.shape == (seq, batch, nx) and Y.shape == (seq, batch)
    assert jnp.allclose(X, X_ref, atol=2e-4, rtol=2e-4)
    assert jnp.allclose(Y, Y_ref, atol=2e-4, rtol=2e-4)

    # Case 2: multi-chunk + multi-block path (small L forced, zero-padded tail).
    seq2 = 50
    k2 = jax.random.split(ks[7], 3)
    M2 = jax.random.uniform(k2[0], (seq2, batch, nu), jnp.float32)
    DT2 = jax.random.uniform(k2[1], (seq2, batch, nu), jnp.float32)
    D2 = jax.random.uniform(k2[2], (seq2, batch, nd), jnp.float32)
    Xa, Ya = ssm_white_forward(params, x0, M2, DT2, D2, time_chunk=12, block_len=4)
    jax.block_until_ready((Xa, Ya))
    Xa_ref, Ya_ref = ssm_white_reference(params, x0, M2, DT2, D2)
    assert Xa.shape == (seq2, batch, nx) and Ya.shape == (seq2, batch)
    assert jnp.allclose(Xa, Xa_ref, atol=2e-4, rtol=2e-4)
    assert jnp.allclose(Ya, Ya_ref, atol=2e-4, rtol=2e-4)

    # Case 3: default path with several 32-step blocks (L*nx = 256 MXU tiles).
    seq3 = 100
    k3 = jax.random.split(k2[2], 3)
    M3 = jax.random.uniform(k3[0], (seq3, batch, nu), jnp.float32)
    DT3 = jax.random.uniform(k3[1], (seq3, batch, nu), jnp.float32)
    D3 = jax.random.uniform(k3[2], (seq3, batch, nd), jnp.float32)
    Xb, Yb = ssm_white_forward(params, x0, M3, DT3, D3)
    jax.block_until_ready((Xb, Yb))
    Xb_ref, Yb_ref = ssm_white_reference(params, x0, M3, DT3, D3)
    assert Xb.shape == (seq3, batch, nx) and Yb.shape == (seq3, batch)
    assert jnp.allclose(Xb, Xb_ref, atol=2e-4, rtol=2e-4)
    assert jnp.allclose(Yb, Yb_ref, atol=2e-4, rtol=2e-4)

    print("KERNEL_OK")
</pallas_src>

<mosaic_0001>
module attributes {stable_mosaic.version = 11 : i64} {
  func.func @ssm_white_kernel(%arg0: i32, %arg1: memref<32x64xf32, #tpu.memory_space<vmem>>, %arg2: memref<24x64xf32, #tpu.memory_space<vmem>>, %arg3: memref<8x64xf32, #tpu.memory_space<vmem>>, %arg4: memref<2x8xf32, #tpu.memory_space<vmem>>, %arg5: memref<1x2x32xf32, #tpu.memory_space<vmem>>, %arg6: memref<1x2x32xf32, #tpu.memory_space<vmem>>, %arg7: memref<1x2x24xf32, #tpu.memory_space<vmem>>, %arg8: memref<1x2x64xf32, #tpu.memory_space<vmem>>, %arg9: memref<2x8xf32, #tpu.memory_space<vmem>>) attributes {dimension_semantics = [#tpu.dimension_semantics<arbitrary>], iteration_bounds = array<i64: 1>, scalar_prefetch = 0 : i64, scratch_operands = 1 : i64, tpu.core_type = #tpu.core_type<tc>, window_params = [{pipeline_mode = #tpu.pipeline_mode<synchronous>, transform_indices = @transform_0, window_bounds = array<i64: 32, 64>}, {pipeline_mode = #tpu.pipeline_mode<synchronous>, transform_indices = @transform_1, window_bounds = array<i64: 24, 64>}, {pipeline_mode = #tpu.pipeline_mode<synchronous>, transform_indices = @transform_2, window_bounds = array<i64: 8, 64>}, {pipeline_mode = #tpu.pipeline_mode<synchronous>, transform_indices = @transform_3, window_bounds = array<i64: 2, 8>}, {transform_indices = @transform_4, window_bounds = array<i64: 1, 2, 32>}, {transform_indices = @transform_5, window_bounds = array<i64: 1, 2, 32>}, {transform_indices = @transform_6, window_bounds = array<i64: 1, 2, 24>}, {transform_indices = @transform_7, window_bounds = array<i64: 1, 2, 64>}]} {
    %c0_i32 = arith.constant 0 : i32
    %0 = arith.cmpi eq, %arg0, %c0_i32 : i32
    %1 = arith.extui %0 : i1 to i32
    %c0_i32_0 = arith.constant 0 : i32
    %2 = arith.cmpi ne, %1, %c0_i32_0 : i32
    scf.if %2 {
      %c0_21 = arith.constant 0 : index
      %c0_22 = arith.constant 0 : index
      %28 = vector.load %arg4[%c0_21, %c0_22] : memref<2x8xf32, #tpu.memory_space<vmem>>, vector<2x8xf32>
      %c0_23 = arith.constant 0 : index
      %c0_24 = arith.constant 0 : index
      %29 = vector.load %arg9[%c0_23, %c0_24] : memref<2x8xf32, #tpu.memory_space<vmem>>, vector<2x8xf32>
      tpu.vector_store %arg9[%c0_23, %c0_24], %28 {strides = array<i32>} : memref<2x8xf32, #tpu.memory_space<vmem>>, vector<2x8xf32>,
    } else {
    }
    %c0 = arith.constant 0 : index
    %c0_1 = arith.constant 0 : index
    %3 = vector.load %arg1[%c0, %c0_1] : memref<32x64xf32, #tpu.memory_space<vmem>>, vector<32x64xf32>
    %c0_2 = arith.constant 0 : index
    %c0_3 = arith.constant 0 : index
    %4 = vector.load %arg2[%c0_2, %c0_3] : memref<24x64xf32, #tpu.memory_space<vmem>>, vector<24x64xf32>
    %c0_4 = arith.constant 0 : index
    %c0_5 = arith.constant 0 : index
    %5 = vector.load %arg3[%c0_4, %c0_5] : memref<8x64xf32, #tpu.memory_space<vmem>>, vector<8x64xf32>
    %c0_6 = arith.constant 0 : index
    %c0_7 = arith.constant 0 : index
    %6 = vector.load %arg9[%c0_6, %c0_7] : memref<2x8xf32, #tpu.memory_space<vmem>>, vector<2x8xf32>
    %c0_i32_8 = arith.constant 0 : i32
    %7 = arith.index_cast %c0_i32_8 : i32 to index
    %c0_9 = arith.constant 0 : index
    %c0_10 = arith.constant 0 : index
    %8 = vector.load %arg5[%7, %c0_9, %c0_10] : memref<1x2x32xf32, #tpu.memory_space<vmem>>, vector<1x2x32xf32>
    %9 = vector.shape_cast %8 : vector<1x2x32xf32> to vector<2x32xf32>
    %10 = arith.index_cast %c0_i32_8 : i32 to index
    %c0_11 = arith.constant 0 : index
    %c0_12 = arith.constant 0 : index
    %11 = vector.load %arg6[%10, %c0_11, %c0_12] : memref<1x2x32xf32, #tpu.memory_space<vmem>>, vector<1x2x32xf32>
    %12 = vector.shape_cast %11 : vector<1x2x32xf32> to vector<2x32xf32>
    %13 = arith.mulf %9, %12 : vector<2x32xf32>
    %cst = arith.constant dense<0.000000e+00> : vector<2x64xf32>
    %14 = tpu.matmul %13, %3, %cst {dimension_numbers = #tpu.dot_dimension_numbers<[1], [0], [0], [1], [0, 0, 1, 1], [], []>} : vector<2x32xf32>, vector<32x64xf32>, vector<2x64xf32> -> vector<2x64xf32>
    %15 = arith.index_cast %c0_i32_8 : i32 to index
    %c0_13 = arith.constant 0 : index
    %c0_14 = arith.constant 0 : index
    %16 = vector.load %arg7[%15, %c0_13, %c0_14] : memref<1x2x24xf32, #tpu.memory_space<vmem>>, vector<1x2x24xf32>
    %17 = vector.shape_cast %16 : vector<1x2x24xf32> to vector<2x24xf32>
    %cst_15 = arith.constant dense<0.000000e+00> : vector<2x64xf32>
    %18 = tpu.matmul %17, %4, %cst_15 {dimension_numbers = #tpu.dot_dimension_numbers<[1], [0], [0], [1], [0, 0, 1, 1], [], []>} : vector<2x24xf32>, vector<24x64xf32>, vector<2x64xf32> -> vector<2x64xf32>
    %19 = arith.addf %14, %18 : vector<2x64xf32>
    %cst_16 = arith.constant dense<0.000000e+00> : vector<2x64xf32>
    %20 = tpu.matmul %6, %5, %cst_16 {dimension_numbers = #tpu.dot_dimension_numbers<[1], [0], [0], [1], [0, 0, 1, 1], [], []>} : vector<2x8xf32>, vector<8x64xf32>, vector<2x64xf32> -> vector<2x64xf32>
    %21 = arith.addf %19, %20 : vector<2x64xf32>
    %22 = arith.index_cast %c0_i32_8 : i32 to index
    %c0_17 = arith.constant 0 : index
    %c0_18 = arith.constant 0 : index
    %23 = vector.load %arg8[%22, %c0_17, %c0_18] : memref<1x2x64xf32, #tpu.memory_space<vmem>>, vector<1x2x64xf32>
    %24 = vector.shape_cast %23 : vector<1x2x64xf32> to vector<2x64xf32>
    %25 = vector.shape_cast %21 : vector<2x64xf32> to vector<1x2x64xf32>
    tpu.vector_store %arg8[%22, %c0_17, %c0_18], %25 {strides = array<i32>} : memref<1x2x64xf32, #tpu.memory_space<vmem>>, vector<1x2x64xf32>,
    %26 = vector.extract_strided_slice %21 {offsets = [0, 56], sizes = [2, 8], strides = [1, 1]} : vector<2x64xf32> to vector<2x8xf32>
    %c1_i32 = arith.constant 1 : i32
    %c0_19 = arith.constant 0 : index
    %c0_20 = arith.constant 0 : index
    %27 = vector.load %arg9[%c0_19, %c0_20] : memref<2x8xf32, #tpu.memory_space<vmem>>, vector<2x8xf32>
    tpu.vector_store %arg9[%c0_19, %c0_20], %26 {strides = array<i32>} : memref<2x8xf32, #tpu.memory_space<vmem>>, vector<2x8xf32>,
    return
  }
  func.func @transform_0(%arg0: i32) -> (i32, i32) {
    %c0_i32 = arith.constant 0 : i32
    %c0_i32_0 = arith.constant 0 : i32
    %c0_i32_1 = arith.constant 0 : i32
    return %c0_i32, %c0_i32_0 : i32, i32
  }
  func.func @transform_1(%arg0: i32) -> (i32, i32) {
    %c0_i32 = arith.constant 0 : i32
    %c0_i32_0 = arith.constant 0 : i32
    %c0_i32_1 = arith.constant 0 : i32
    return %c0_i32, %c0_i32_0 : i32, i32
  }
  func.func @transform_2(%arg0: i32) -> (i32, i32) {
    %c0_i32 = arith.constant 0 : i32
    %c0_i32_0 = arith.constant 0 : i32
    %c0_i32_1 = arith.constant 0 : i32
    return %c0_i32, %c0_i32_0 : i32, i32
  }
  func.func @transform_3(%arg0: i32) -> (i32, i32) {
    %c0_i32 = arith.constant 0 : i32
    %c0_i32_0 = arith.constant 0 : i32
    %c0_i32_1 = arith.constant 0 : i32
    return %c0_i32, %c0_i32_0 : i32, i32
  }
  func.func @transform_4(%arg0: i32) -> (i32, i32, i32) {
    %c0_i32 = arith.constant 0 : i32
    %c0_i32_0 = arith.constant 0 : i32
    %c0_i32_1 = arith.constant 0 : i32
    return %arg0, %c0_i32, %c0_i32_0 : i32, i32, i32
  }
  func.func @transform_5(%arg0: i32) -> (i32, i32, i32) {
    %c0_i32 = arith.constant 0 : i32
    %c0_i32_0 = arith.constant 0 : i32
    %c0_i32_1 = arith.constant 0 : i32
    return %arg0, %c0_i32, %c0_i32_0 : i32, i32, i32
  }
  func.func @transform_6(%arg0: i32) -> (i32, i32, i32) {
    %c0_i32 = arith.constant 0 : i32
    %c0_i32_0 = arith.constant 0 : i32
    %c0_i32_1 = arith.constant 0 : i32
    return %arg0, %c0_i32, %c0_i32_0 : i32, i32, i32
  }
  func.func @transform_7(%arg0: i32) -> (i32, i32, i32) {
    %c0_i32 = arith.constant 0 : i32
    %c0_i32_0 = arith.constant 0 : i32
    %c0_i32_1 = arith.constant 0 : i32
    return %arg0, %c0_i32, %c0_i32_0 : i32, i32, i32
  }
}

</mosaic_0001>

<llo_original>
// kernel: tpu_custom_call.1
$region0: #{tpu_custom_call.1}
  #allocation0 [shape = 'u32[]', space=smem, size = 0x4, offset = 0x4, fixed_abs, tag = 'smem constant byte address 0x4 - core index']
  #allocation1 [shape = 'u32[144,128]{1,0:T(1,128)}', space=vmem, size = 0x12000, scoped, tag = 'internal scratch']
  #allocation2 [shape = 'f32[2,8]{1,0:T(2,128)}', space=vmem, size = 0x400, scoped, tag = 'scratch operand']
  %s0 = inlined_call_operand.hbm [shape: f32[32,64], index: 0, kind: input, shape index: {}]
  %s1 = inlined_call_operand.hbm [shape: f32[24,64], index: 1, kind: input, shape index: {}]
  %s2 = inlined_call_operand.hbm [shape: f32[8,64], index: 2, kind: input, shape index: {}]
  %s3 = inlined_call_operand.vmem [shape: f32[2,8], index: 3, kind: input, shape index: {}]
  %s4 = inlined_call_operand.vmem [shape: f32[1,2,32], index: 4, kind: input, shape index: {}]
  %s5 = inlined_call_operand.vmem [shape: f32[1,2,32], index: 5, kind: input, shape index: {}]
  %s6 = inlined_call_operand.vmem [shape: f32[1,2,24], index: 6, kind: input, shape index: {}]
  %s7 = inlined_call_operand.hbm [shape: f32[1,2,64], index: 7, kind: output, shape index: {}]
  %s8 = sld [smem:[#allocation0]]
  $region54: #{tpu_custom_call.1} parent=0
    _
  %s10 = ssub.s32 1, %s8
  %s11 = scalar_select 0, %s10, %s8
  $region1: #{tpu_custom_call.1} parent=0
    #allocation3 [shape = 'u8[16384]{0}', space=vmem, size = 0x4000, scoped, tag = 'input window, operand 0, single buffered']
    #allocation4 [shape = 's32[1]{0}', space=sflag, size = 0x4, scoped, tag = 'scoped memory for tpu_custom_call.1']
    #allocation5 [shape = 's32[1]{0}', space=sflag, size = 0x4, scoped, tag = 'scoped memory for tpu_custom_call.1']
    #allocation6 [shape = 'u8[12288]{0}', space=vmem, size = 0x3000, scoped, tag = 'input window, operand 1, single buffered']
    #allocation7 [shape = 's32[1]{0}', space=sflag, size = 0x4, scoped, tag = 'scoped memory for tpu_custom_call.1']
    #allocation8 [shape = 'u8[4096]{0}', space=vmem, size = 0x1000, scoped, tag = 'input window, operand 2, single buffered']
    #allocation9 [shape = 'u8[1024]{0}', space=vmem, size = 0x400, scoped, tag = 'output window, operand 0, single buffered']
    %12 = vsyncpa [#allocation4], 0
    %13 = vsyncpa [#allocation7], 0
    %14 = vsyncpa [#allocation5], 0
    // Predicated region
    $region2: #{tpu_custom_call.1} parent=1 // pred_check
      _
    $region3: #{tpu_custom_call.1} parent=1 // pred_check_branch
      %16 = sbr.rel (0) target = $region5
    $region4: #{tpu_custom_call.1} parent=1 // pred_region
      %s18 = ssub.s32 512, 512
      %19 = vsyncadd [#allocation4], %s18
      %s20 = sshll.u32 [#allocation3], 4
      %s21 = int_to_ptr.vmem [resolvable:$true] %s20
      %26 = dma.hbm_to_vmem [thread:$0]  %s0, 512, %s21, [#allocation4], 128, 128, 8
    $region5: #{tpu_custom_call.1} parent=1 // pred_fallthru
      _
    // Predicated region
    $region6: #{tpu_custom_call.1} parent=1 // pred_check
      _
    $region7: #{tpu_custom_call.1} parent=1 // pred_check_branch
      %28 = sbr.rel (0) target = $region9
    $region8: #{tpu_custom_call.1} parent=1 // pred_region
      %s30 = ssub.s32 384, 384
      %31 = vsyncadd [#allocation7], %s30
      %s32 = sshll.u32 [#allocation6], 4
      %s33 = int_to_ptr.vmem [resolvable:$true] %s32
      %38 = dma.hbm_to_vmem [thread:$0]  %s1, 384, %s33, [#allocation7], 128, 128, 8
    $region9: #{tpu_custom_call.1} parent=1 // pred_fallthru
      _
    // Predicated region
    $region10: #{tpu_custom_call.1} parent=1 // pred_check
      _
    $region11: #{tpu_custom_call.1} parent=1 // pred_check_branch
      %40 = sbr.rel (0) target = $region13
    $region12: #{tpu_custom_call.1} parent=1 // pred_region
      %s42 = ssub.s32 128, 128
      %43 = vsyncadd [#allocation7], %s42
      %s45 = sshll.u32 [#allocation8], 4
      %s46 = int_to_ptr.vmem [resolvable:$true] %s45
      %48 = dma.hbm_to_vmem [thread:$0]  %s2, 128, %s46, [#allocation7]
    $region13: #{tpu_custom_call.1} parent=1 // pred_fallthru
      _
    // Predicated region
    $region14: #{tpu_custom_call.1} parent=1 // pred_check
      _
    $region15: #{tpu_custom_call.1} parent=1 // pred_check_branch
      %50 = sbr.rel (0) target = $region17
    $region16: #{tpu_custom_call.1} parent=1 // pred_region
      _
    $region17: #{tpu_custom_call.1} parent=1 // pred_fallthru
      _
    // Predicated region
    $region18: #{tpu_custom_call.1} parent=1 // pred_check
      _
    $region19: #{tpu_custom_call.1} parent=1 // pred_check_branch
      %52 = sbr.rel (0) target = $region21
    $region20: #{tpu_custom_call.1} parent=1 // pred_region
      _
    $region21: #{tpu_custom_call.1} parent=1 // pred_fallthru
      _
    // Predicated region
    $region22: #{tpu_custom_call.1} parent=1 // pred_check
      _
    $region23: #{tpu_custom_call.1} parent=1 // pred_check_branch
      %54 = sbr.rel (0) target = $region25
    $region24: #{tpu_custom_call.1} parent=1 // pred_region
      _
    $region25: #{tpu_custom_call.1} parent=1 // pred_fallthru
      _
    // Predicated region
    $region26: #{tpu_custom_call.1} parent=1 // pred_check
      _
    $region27: #{tpu_custom_call.1} parent=1 // pred_check_branch
      %56 = sbr.rel (0) target = $region29
    $region28: #{tpu_custom_call.1} parent=1 // pred_region
      _
    $region29: #{tpu_custom_call.1} parent=1 // pred_fallthru
      _
    // Predicated region
    $region30: #{tpu_custom_call.1} parent=1 // pred_check
      _
    $region31: #{tpu_custom_call.1} parent=1 // pred_check_branch
      %58 = sbr.rel (0) target = $region33
    $region32: #{tpu_custom_call.1} parent=1 // pred_region
      %59 = dma.done [#allocation4], 512
    $region33: #{tpu_custom_call.1} parent=1 // pred_fallthru
      _
    // Predicated region
    $region34: #{tpu_custom_call.1} parent=1 // pred_check
      _
    $region35: #{tpu_custom_call.1} parent=1 // pred_check_branch
      %61 = sbr.rel (0) target = $region37
    $region36: #{tpu_custom_call.1} parent=1 // pred_region
      %62 = dma.done [#allocation7], 384
    $region37: #{tpu_custom_call.1} parent=1 // pred_fallthru
      _
    // Predicated region
    $region38: #{tpu_custom_call.1} parent=1 // pred_check
      _
    $region39: #{tpu_custom_call.1} parent=1 // pred_check_branch
      %64 = sbr.rel (0) target = $region41
    $region40: #{tpu_custom_call.1} parent=1 // pred_region
      %65 = dma.done [#allocation7], 128
    $region41: #{tpu_custom_call.1} parent=1 // pred_fallthru
      _
    %p66 = scmp.eq.s32.totalorder 0, 0
    // Predicated region
    $region42: #{tpu_custom_call.1} parent=1 // pred_check
      %p67 = pneg %p66
    $region43: #{tpu_custom_call.1} parent=1 // pred_check_branch
      %69 = sbr.rel (%p67) target = $region45
    $region44: #{tpu_custom_call.1} parent=1 // pred_region
      %v70 = vld [vmem:[%s3] sm:$0x3]
      %vm71 = vcmask 58368
      %72 = vst.msk [vmem:[#allocation2] sm:$0x3] %vm71, %v70
    $region45: #{tpu_custom_call.1} parent=1 // pred_fallthru
      _
    %v73 = vld [vmem:[#allocation3] sm:$0xff]
    %v74 = vld [vmem:[#allocation3 + $0x8] sm:$0xff]
    %v75 = vld [vmem:[#allocation3 + $0x10] sm:$0xff]
    %v76 = vld [vmem:[#allocation3 + $0x18] sm:$0xff]
    %v77 = vld [vmem:[#allocation6] sm:$0xff]
    %v78 = vld [vmem:[#allocation6 + $0x8] sm:$0xff]
    %v79 = vld [vmem:[#allocation6 + $0x10] sm:$0xff]
    %v80 = vld [vmem:[#allocation8] sm:$0xff]
    %v81 = vld [vmem:[#allocation2] sm:$0x3]
    %v82 = vld [vmem:[%s4] sm:$0x3]
    %v83 = vld [vmem:[%s5] sm:$0x3]
    %v84 = vmul.f32 %v82, %v83
    %v85 = vld [vmem:[%s6] sm:$0x3]
    %vm86 = vcmask 195584
    %v88 = vsel %vm86, %v85, 0
    %90 = vmatprep.subr.mxu0 0.0
    %91 = vmatpush1.msra.mxu0 0.0
    %92 = vmatprep.subr.mxu0 0.0
    %93 = vmatpush1.msra.mxu0 0.0
    %94 = vmatprep.subr.mxu0 0.0
    %95 = vmatpush1.msra.mxu0 0.0
    %96 = vmatprep.subr.mxu0 0.0
    %97 = vmatpush1.msra.mxu0 0.0
    %98 = vmatprep.subr.mxu0 0.0
    %99 = vmatpush1.msra.mxu0 0.0
    %100 = vmatprep.subr.mxu0 0.0
    %101 = vmatpush1.msra.mxu0 0.0
    %102 = vmatprep.subr.mxu0 0.0
    %103 = vmatpush1.msra.mxu0 0.0
    %104 = vmatprep.subr.mxu0 0.0
    %105 = vmatpush1.msra.mxu0 0.0
    %106 = vmatprep.subr.mxu0 0.0
    %107 = vmatpush1.msra.mxu0 0.0
    %108 = vmatprep.subr.mxu0 0.0
    %109 = vmatpush1.msra.mxu0 0.0
    %110 = vmatprep.subr.mxu0 0.0
    %111 = vmatpush1.msra.mxu0 0.0
    %112 = vmatprep.subr.mxu0 0.0
    %113 = vmatpush1.msra.mxu0 0.0
    %114 = vmatprep.subr.mxu0 0.0
    %115 = vmatpush1.msra.mxu0 0.0
    %116 = vmatprep.subr.mxu0 0.0
    %117 = vmatpush1.msra.mxu0 %v79
    %118 = vmatprep.subr.mxu0 0.0
    %119 = vmatpush1.msra.mxu0 %v78
    %120 = vmatprep.subr.mxu0 0.0
    %121 = vmatpush1.msra.mxu0 %v77
    %122 = vmatprep.subr.mxu0 0.0
    %123 = vmatpush2.msra.mxu0 0.0
    %124 = vmatprep.subr.mxu0 0.0
    %125 = vmatpush2.msra.mxu0 0.0
    %126 = vmatprep.subr.mxu0 0.0
    %127 = vmatpush2.msra.mxu0 0.0
    %128 = vmatprep.subr.mxu0 0.0
    %129 = vmatpush2.msra.mxu0 0.0
    %130 = vmatprep.subr.mxu0 0.0
    %131 = vmatpush2.msra.mxu0 0.0
    %132 = vmatprep.subr.mxu0 0.0
    %133 = vmatpush2.msra.mxu0 0.0
    %134 = vmatprep.subr.mxu0 0.0
    %135 = vmatpush2.msra.mxu0 0.0
    %136 = vmatprep.subr.mxu0 0.0
    %137 = vmatpush2.msra.mxu0 0.0
    %138 = vmatprep.subr.mxu0 0.0
    %139 = vmatpush2.msra.mxu0 0.0
    %140 = vmatprep.subr.mxu0 0.0
    %141 = vmatpush2.msra.mxu0 0.0
    %142 = vmatprep.subr.mxu0 0.0
    %143 = vmatpush2.msra.mxu0 0.0
    %144 = vmatprep.subr.mxu0 0.0
    %145 = vmatpush2.msra.mxu0 0.0
    %146 = vmatprep.subr.mxu0 0.0
    %147 = vmatpush2.msra.mxu0 0.0
    %148 = vmatprep.subr.mxu0 0.0
    %149 = vmatpush2.msra.mxu0 0.0
    %150 = vmatprep.subr.mxu0 0.0
    %151 = vmatpush2.msra.mxu0 0.0
    %152 = vmatprep.subr.mxu0 0.0
    %153 = vmatpush2.msra.mxu0 0.0
    %154 = vmatprep.mubr.f32.mxu0 0.0
    %155 = vmatmul.mubr.f32.gmra.mxu0 %v88
    %v156 = vpop.f32.mrf.mxu0
    %v157 = vadd.f32 0.0, %v156
    %v158 = vpop.f32.mrf.mxu0
    %159 = vdwg.mxu0
    %vm160 = vcmask 261120
    %v162 = vsel %vm160, %v84, 0
    %164 = vmatprep.subr.mxu0 0.0
    %165 = vmatpush1.msra.mxu0 0.0
    %166 = vmatprep.subr.mxu0 0.0
    %167 = vmatpush1.msra.mxu0 0.0
    %168 = vmatprep.subr.mxu0 0.0
    %169 = vmatpush1.msra.mxu0 0.0
    %170 = vmatprep.subr.mxu0 0.0
    %171 = vmatpush1.msra.mxu0 0.0
    %172 = vmatprep.subr.mxu0 0.0
    %173 = vmatpush1.msra.mxu0 0.0
    %174 = vmatprep.subr.mxu0 0.0
    %175 = vmatpush1.msra.mxu0 0.0
    %176 = vmatprep.subr.mxu0 0.0
    %177 = vmatpush1.msra.mxu0 0.0
    %178 = vmatprep.subr.mxu0 0.0
    %179 = vmatpush1.msra.mxu0 0.0
    %180 = vmatprep.subr.mxu0 0.0
    %181 = vmatpush1.msra.mxu0 0.0
    %182 = vmatprep.subr.mxu0 0.0
    %183 = vmatpush1.msra.mxu0 0.0
    %184 = vmatprep.subr.mxu0 0.0
    %185 = vmatpush1.msra.mxu0 0.0
    %186 = vmatprep.subr.mxu0 0.0
    %187 = vmatpush1.msra.mxu0 0.0
    %188 = vmatprep.subr.mxu0 0.0
    %189 = vmatpush1.msra.mxu0 %v76
    %190 = vmatprep.subr.mxu0 0.0
    %191 = vmatpush1.msra.mxu0 %v75
    %192 = vmatprep.subr.mxu0 0.0
    %193 = vmatpush1.msra.mxu0 %v74
    %194 = vmatprep.subr.mxu0 0.0
    %195 = vmatpush1.msra.mxu0 %v73
    %196 = vmatprep.subr.mxu0 0.0
    %197 = vmatpush2.msra.mxu0 0.0
    %198 = vmatprep.subr.mxu0 0.0
    %199 = vmatpush2.msra.mxu0 0.0
    %200 = vmatprep.subr.mxu0 0.0
    %201 = vmatpush2.msra.mxu0 0.0
    %202 = vmatprep.subr.mxu0 0.0
    %203 = vmatpush2.msra.mxu0 0.0
    %204 = vmatprep.subr.mxu0 0.0
    %205 = vmatpush2.msra.mxu0 0.0
    %206 = vmatprep.subr.mxu0 0.0
    %207 = vmatpush2.msra.mxu0 0.0
    %208 = vmatprep.subr.mxu0 0.0
    %209 = vmatpush2.msra.mxu0 0.0
    %210 = vmatprep.subr.mxu0 0.0
    %211 = vmatpush2.msra.mxu0 0.0
    %212 = vmatprep.subr.mxu0 0.0
    %213 = vmatpush2.msra.mxu0 0.0
    %214 = vmatprep.subr.mxu0 0.0
    %215 = vmatpush2.msra.mxu0 0.0
    %216 = vmatprep.subr.mxu0 0.0
    %217 = vmatpush2.msra.mxu0 0.0
    %218 = vmatprep.subr.mxu0 0.0
    %219 = vmatpush2.msra.mxu0 0.0
    %220 = vmatprep.subr.mxu0 0.0
    %221 = vmatpush2.msra.mxu0 0.0
    %222 = vmatprep.subr.mxu0 0.0
    %223 = vmatpush2.msra.mxu0 0.0
    %224 = vmatprep.subr.mxu0 0.0
    %225 = vmatpush2.msra.mxu0 0.0
    %226 = vmatprep.subr.mxu0 0.0
    %227 = vmatpush2.msra.mxu0 0.0
    %228 = vmatprep.mubr.f32.mxu0 0.0
    %229 = vmatmul.mubr.f32.gmra.mxu0 %v162
    %v230 = vpop.f32.mrf.mxu0
    %v231 = vadd.f32 %v157, %v230
    %v232 = vpop.f32.mrf.mxu0
    %233 = vdwg.mxu0
    %vm234 = vcmask 64512
    %v236 = vsel %vm234, %v81, 0
    %238 = vmatprep.subr.mxu0 0.0
    %239 = vmatpush1.msra.mxu0 0.0
    %240 = vmatprep.subr.mxu0 0.0
    %241 = vmatpush1.msra.mxu0 0.0
    %242 = vmatprep.subr.mxu0 0.0
    %243 = vmatpush1.msra.mxu0 0.0
    %244 = vmatprep.subr.mxu0 0.0
    %245 = vmatpush1.msra.mxu0 0.0
    %246 = vmatprep.subr.mxu0 0.0
    %247 = vmatpush1.msra.mxu0 0.0
    %248 = vmatprep.subr.mxu0 0.0
    %249 = vmatpush1.msra.mxu0 0.0
    %250 = vmatprep.subr.mxu0 0.0
    %251 = vmatpush1.msra.mxu0 0.0
    %252 = vmatprep.subr.mxu0 0.0
    %253 = vmatpush1.msra.mxu0 0.0
    %254 = vmatprep.subr.mxu0 0.0
    %255 = vmatpush1.msra.mxu0 0.0
    %256 = vmatprep.subr.mxu0 0.0
    %257 = vmatpush1.msra.mxu0 0.0
    %258 = vmatprep.subr.mxu0 0.0
    %259 = vmatpush1.msra.mxu0 0.0
    %260 = vmatprep.subr.mxu0 0.0
    %261 = vmatpush1.msra.mxu0 0.0
    %262 = vmatprep.subr.mxu0 0.0
    %263 = vmatpush1.msra.mxu0 0.0
    %264 = vmatprep.subr.mxu0 0.0
    %265 = vmatpush1.msra.mxu0 0.0
    %266 = vmatprep.subr.mxu0 0.0
    %267 = vmatpush1.msra.mxu0 0.0
    %268 = vmatprep.subr.mxu0 0.0
    %269 = vmatpush1.msra.mxu0 %v80
    %270 = vmatprep.subr.mxu0 0.0
    %271 = vmatpush2.msra.mxu0 0.0
    %272 = vmatprep.subr.mxu0 0.0
    %273 = vmatpush2.msra.mxu0 0.0
    %274 = vmatprep.subr.mxu0 0.0
    %275 = vmatpush2.msra.mxu0 0.0
    %276 = vmatprep.subr.mxu0 0.0
    %277 = vmatpush2.msra.mxu0 0.0
    %278 = vmatprep.subr.mxu0 0.0
    %279 = vmatpush2.msra.mxu0 0.0
    %280 = vmatprep.subr.mxu0 0.0
    %281 = vmatpush2.msra.mxu0 0.0
    %282 = vmatprep.subr.mxu0 0.0
    %283 = vmatpush2.msra.mxu0 0.0
    %284 = vmatprep.subr.mxu0 0.0
    %285 = vmatpush2.msra.mxu0 0.0
    %286 = vmatprep.subr.mxu0 0.0
    %287 = vmatpush2.msra.mxu0 0.0
    %288 = vmatprep.subr.mxu0 0.0
    %289 = vmatpush2.msra.mxu0 0.0
    %290 = vmatprep.subr.mxu0 0.0
    %291 = vmatpush2.msra.mxu0 0.0
    %292 = vmatprep.subr.mxu0 0.0
    %293 = vmatpush2.msra.mxu0 0.0
    %294 = vmatprep.subr.mxu0 0.0
    %295 = vmatpush2.msra.mxu0 0.0
    %296 = vmatprep.subr.mxu0 0.0
    %297 = vmatpush2.msra.mxu0 0.0
    %298 = vmatprep.subr.mxu0 0.0
    %299 = vmatpush2.msra.mxu0 0.0
    %300 = vmatprep.subr.mxu0 0.0
    %301 = vmatpush2.msra.mxu0 0.0
    %302 = vmatprep.mubr.f32.mxu0 0.0
    %303 = vmatmul.mubr.f32.gmra.mxu0 %v236
    %v304 = vpop.f32.mrf.mxu0
    %v305 = vadd.f32 0.0, %v304
    %v306 = vpop.f32.mrf.mxu0
    %307 = vdwg.mxu0
    %v308 = vadd.f32 %v231, %v305
    %vm309 = vcmask 517120
    %310 = vst.msk [vmem:[#allocation9] sm:$0x3] %vm309, %v308
    %312 = vrot.lane.b32.xlu0 %v308, 72
    %v313 = vpop.permute.xlu0 %312
    %vm315 = vcmask 58368
    %316 = vst.msk [vmem:[#allocation2] sm:$0x3] %vm315, %v313
    // Predicated region
    $region46: #{tpu_custom_call.1} parent=1 // pred_check
      _
    $region47: #{tpu_custom_call.1} parent=1 // pred_check_branch
      %318 = sbr.rel (0) target = $region49
    $region48: #{tpu_custom_call.1} parent=1 // pred_region
      %s320 = ssub.s32 32, 32
      %321 = vsyncadd [#allocation5], %s320
      %s323 = sshll.u32 [#allocation9], 4
      %s324 = int_to_ptr.vmem [resolvable:$true] %s323
      %326 = dma.vmem_to_hbm [thread:$0]  %s324, 32, %s7, [#allocation5]
    $region49: #{tpu_custom_call.1} parent=1 // pred_fallthru
      _
    // Predicated region
    $region50: #{tpu_custom_call.1} parent=1 // pred_check
      _
    $region51: #{tpu_custom_call.1} parent=1 // pred_check_branch
      %328 = sbr.rel (0) target = $region53
    $region52: #{tpu_custom_call.1} parent=1 // pred_region
      %329 = dma.done [#allocation5], 32
    $region53: #{tpu_custom_call.1} parent=1 // pred_fallthru
      _
    %330 = vsyncpa [#allocation4], 1
    %331 = vsyncpa [#allocation7], 1
    %332 = vsyncpa [#allocation5], 1

</llo_original>
